<compile_context>
chip_gen: v7x
topology: tpu7x:2x2x1
jax: 0.10.0
libtpu: 0.0.40
codegen_flags: <defaults>
</compile_context>

<pallas_src>
import math

import jax
import jax.numpy as jnp
from jax.experimental import pallas as pl
from jax.experimental.pallas import tpu as pltpu

_LANES = 128          # pad embed_dim up to a multiple of this -> lane-dense stores
_TILE_M_MAX = 2048    # rows per grid step; ~2.9 MiB double-buffered in f32,
                      # fits even the 16 MiB scoped-VMEM default on v5e


def _patch_embed_kernel(x_ref, w_ref, b_ref, o_ref):
    # x_ref: (TM, K) patch tile | w_ref: (K, Np) | b_ref: (1, Np) | o_ref: (TM, Np)
    acc = jnp.dot(x_ref[...], w_ref[...], preferred_element_type=jnp.float32)
    o_ref[...] = (acc + b_ref[...].astype(jnp.float32)).astype(o_ref.dtype)


def _round_up(v, m):
    return -(-v // m) * m


def patch_embed_forward(x, weight, bias, patch_size=4, *, stream_dtype=None):
    """PatchEmbed forward (conv projection, no norm).

    x: (B, C, H, W) NCHW.  weight: (embed_dim, C, ps, ps).  bias: (embed_dim,).
    Returns (B, embed_dim, ceil(H/ps), ceil(W/ps)) NCHW, matching the PyTorch
    module (pad right/bottom, then stride-ps conv).
    stream_dtype: optionally jnp.bfloat16 to stream patches/weights at half
    width on v6e/v7x (accumulation stays f32).
    """
    B, C, H, W = x.shape
    ps = patch_size
    embed_dim = weight.shape[0]
    out_dtype = x.dtype

    # Same padding semantics as the PyTorch forward (pad right / bottom).
    pad_w = (-W) % ps
    pad_h = (-H) % ps
    if pad_w or pad_h:
        x = jnp.pad(x, ((0, 0), (0, 0), (0, pad_h), (0, pad_w)))
    Hp, Wp = (H + pad_h) // ps, (W + pad_w) // ps

    # im2col: non-overlapping patches flattened in (C, kh, kw) order to match
    # the Conv2d weight layout (out, in, kh, kw).
    # TODO(synk): fuse this patch extraction (and the final NCHW transpose)
    # into the kernel via a blocked x BlockSpec + in-VMEM relayout to remove
    # the extra HBM round trips (op is HBM-bandwidth bound).
    xp = x.reshape(B, C, Hp, ps, Wp, ps)
    xp = jnp.transpose(xp, (0, 2, 4, 1, 3, 5))            # (B, Hp, Wp, C, ps, ps)
    patches = xp.reshape(B * Hp * Wp, C * ps * ps)        # (M, K)

    K = C * ps * ps
    M = B * Hp * Wp
    Np = _round_up(embed_dim, _LANES)                     # lane-dense output width

    # (K, Np) weights / (1, Np) bias; lanes beyond embed_dim are exactly zero.
    w_mat = weight.reshape(embed_dim, K).T                # (K, embed_dim)
    w_mat = jnp.pad(w_mat, ((0, 0), (0, Np - embed_dim)))
    b_mat = jnp.pad(bias, (0, Np - embed_dim)).reshape(1, Np)

    if stream_dtype is not None:
        patches = patches.astype(stream_dtype)
        w_mat = w_mat.astype(stream_dtype)

    # Tile M.  Typical Swin shapes divide exactly; otherwise zero-pad a few rows.
    tm = min(_TILE_M_MAX, _round_up(M, 8))
    M_pad = _round_up(M, tm)
    if M_pad != M:
        patches = jnp.pad(patches, ((0, M_pad - M), (0, 0)))
    grid_m = M_pad // tm

    cost = pl.CostEstimate(
        flops=2 * M_pad * K * Np,
        transcendentals=0,
        bytes_accessed=(patches.size * patches.dtype.itemsize
                        + w_mat.size * w_mat.dtype.itemsize
                        + b_mat.size * b_mat.dtype.itemsize
                        + M_pad * Np * out_dtype.itemsize),
    )

    out = pl.pallas_call(
        _patch_embed_kernel,
        out_shape=jax.ShapeDtypeStruct((M_pad, Np), out_dtype),
        grid_spec=pltpu.PrefetchScalarGridSpec(
            num_scalar_prefetch=0,
            grid=(grid_m,),
            in_specs=[
                pl.BlockSpec((tm, K), lambda i: (i, 0)),
                pl.BlockSpec((K, Np), lambda i: (0, 0)),   # stays VMEM-resident
                pl.BlockSpec((1, Np), lambda i: (0, 0)),   # stays VMEM-resident
            ],
            out_specs=pl.BlockSpec((tm, Np), lambda i: (i, 0)),
        ),
        compiler_params=pltpu.CompilerParams(
            dimension_semantics=("parallel",)),
        cost_estimate=cost,
    )(patches, w_mat, b_mat)

    # (M_pad, Np) -> valid rows/lanes -> (B, Hp, Wp, N) -> NCHW (B, N, Hp, Wp).
    out = out[:M, :embed_dim].reshape(B, Hp, Wp, embed_dim)
    out = jnp.transpose(out, (0, 3, 1, 2))
    return out


def init_params(key, in_chans=3, embed_dim=96, patch_size=4):
    """Deterministic Conv2d init matching the module's _init_weights:
    weight ~ N(0, sqrt(2 / fan_out)), bias = 0, fan_out = kh*kw*out_channels."""
    fan_out = patch_size * patch_size * embed_dim
    std = math.sqrt(2.0 / fan_out)
    weight = std * jax.random.normal(
        key, (embed_dim, in_chans, patch_size, patch_size), dtype=jnp.float32)
    bias = jnp.zeros((embed_dim,), dtype=jnp.float32)
    return weight, bias


if __name__ == "__main__":
    key = jax.random.PRNGKey(0)
    k_x, k_w = jax.random.split(key)

    B, C, H, W = 2, 3, 16, 16
    patch_size = 4
    embed_dim = 96

    x = jax.random.normal(k_x, (B, C, H, W), dtype=jnp.float32)
    weight, bias = init_params(k_w, in_chans=C, embed_dim=embed_dim,
                               patch_size=patch_size)

    out = patch_embed_forward(x, weight, bias, patch_size=patch_size)
    out = jax.block_until_ready(out)

    # Sanity check against a pure-JAX reference (strided conv).  Note: H, W are
    # divisible by patch_size here, so VALID conv on the unpadded x is exact.
    ref = jax.lax.conv_general_dilated(
        x, weight, window_strides=(patch_size, patch_size), padding="VALID",
        dimension_numbers=("NCHW", "OIHW", "NCHW")) + bias.reshape(1, -1, 1, 1)
    assert out.shape == (B, embed_dim, H // patch_size, W // patch_size)
    assert jnp.allclose(out, ref, atol=1e-4, rtol=1e-4)

    print("KERNEL_OK")
</pallas_src>

<mosaic_0001>
module attributes {stable_mosaic.version = 11 : i64} {
  func.func @_patch_embed_kernel(%arg0: i32, %arg1: memref<32x48xf32, #tpu.memory_space<vmem>>, %arg2: memref<48x128xf32, #tpu.memory_space<vmem>>, %arg3: memref<1x128xf32, #tpu.memory_space<vmem>>, %arg4: memref<32x128xf32, #tpu.memory_space<vmem>>) attributes {dimension_semantics = [#tpu.dimension_semantics<parallel>], iteration_bounds = array<i64: 1>, scalar_prefetch = 0 : i64, scratch_operands = 0 : i64, tpu.core_type = #tpu.core_type<tc>, window_params = [{transform_indices = @transform_0, window_bounds = array<i64: 32, 48>}, {pipeline_mode = #tpu.pipeline_mode<synchronous>, transform_indices = @transform_1, window_bounds = array<i64: 48, 128>}, {pipeline_mode = #tpu.pipeline_mode<synchronous>, transform_indices = @transform_2, window_bounds = array<i64: 1, 128>}, {transform_indices = @transform_3, window_bounds = array<i64: 32, 128>}]} {
    %c0 = arith.constant 0 : index
    %c0_0 = arith.constant 0 : index
    %0 = vector.load %arg1[%c0, %c0_0] : memref<32x48xf32, #tpu.memory_space<vmem>>, vector<32x48xf32>
    %c0_1 = arith.constant 0 : index
    %c0_2 = arith.constant 0 : index
    %1 = vector.load %arg2[%c0_1, %c0_2] : memref<48x128xf32, #tpu.memory_space<vmem>>, vector<48x128xf32>
    %cst = arith.constant dense<0.000000e+00> : vector<32x128xf32>
    %2 = tpu.matmul %0, %1, %cst {dimension_numbers = #tpu.dot_dimension_numbers<[1], [0], [0], [1], [0, 0, 1, 1], [], []>} : vector<32x48xf32>, vector<48x128xf32>, vector<32x128xf32> -> vector<32x128xf32>
    %c0_3 = arith.constant 0 : index
    %c0_4 = arith.constant 0 : index
    %3 = vector.load %arg3[%c0_3, %c0_4] : memref<1x128xf32, #tpu.memory_space<vmem>>, vector<1x128xf32>
    %4 = vector.broadcast %3 : vector<1x128xf32> to vector<32x128xf32>
    %5 = arith.addf %2, %4 : vector<32x128xf32>
    %c0_5 = arith.constant 0 : index
    %c0_6 = arith.constant 0 : index
    %6 = vector.load %arg4[%c0_5, %c0_6] : memref<32x128xf32, #tpu.memory_space<vmem>>, vector<32x128xf32>
    tpu.vector_store %arg4[%c0_5, %c0_6], %5 {strides = array<i32>} : memref<32x128xf32, #tpu.memory_space<vmem>>, vector<32x128xf32>,
    return
  }
  func.func @transform_0(%arg0: i32) -> (i32, i32) {
    %c0_i32 = arith.constant 0 : i32
    %c0_i32_0 = arith.constant 0 : i32
    return %arg0, %c0_i32 : i32, i32
  }
  func.func @transform_1(%arg0: i32) -> (i32, i32) {
    %c0_i32 = arith.constant 0 : i32
    %c0_i32_0 = arith.constant 0 : i32
    %c0_i32_1 = arith.constant 0 : i32
    return %c0_i32, %c0_i32_0 : i32, i32
  }
  func.func @transform_2(%arg0: i32) -> (i32, i32) {
    %c0_i32 = arith.constant 0 : i32
    %c0_i32_0 = arith.constant 0 : i32
    %c0_i32_1 = arith.constant 0 : i32
    return %c0_i32, %c0_i32_0 : i32, i32
  }
  func.func @transform_3(%arg0: i32) -> (i32, i32) {
    %c0_i32 = arith.constant 0 : i32
    %c0_i32_0 = arith.constant 0 : i32
    return %arg0, %c0_i32 : i32, i32
  }
}

</mosaic_0001>

<llo_original>
// kernel: tpu_custom_call.1
$region0: #{tpu_custom_call.1}
  #allocation0 [shape = 'u32[]', space=smem, size = 0x4, offset = 0x4, fixed_abs, tag = 'smem constant byte address 0x4 - core index']
  #allocation1 [shape = 'u32[144,128]{1,0:T(1,128)}', space=vmem, size = 0x12000, scoped, tag = 'internal scratch']
  %s0 = inlined_call_operand.hbm [shape: f32[32,48], index: 0, kind: input, shape index: {}]
  %s1 = inlined_call_operand.hbm [shape: f32[48,128], index: 1, kind: input, shape index: {}]
  %s2 = inlined_call_operand.vmem [shape: f32[1,128], index: 2, kind: input, shape index: {}]
  %s3 = inlined_call_operand.hbm [shape: f32[32,128], index: 3, kind: output, shape index: {}]
  %s4 = sld [smem:[#allocation0]]
  $region30: #{tpu_custom_call.1} parent=0
    _
  %s6 = ssub.s32 1, %s4
  %s7 = scalar_select 0, %s6, %s4
  $region1: #{tpu_custom_call.1} parent=0
    #allocation2 [shape = 'u8[16384]{0}', space=vmem, size = 0x4000, scoped, tag = 'input window, operand 0, single buffered']
    #allocation3 [shape = 's32[1]{0}', space=sflag, size = 0x4, scoped, tag = 'scoped memory for tpu_custom_call.1']
    #allocation4 [shape = 's32[1]{0}', space=sflag, size = 0x4, scoped, tag = 'scoped memory for tpu_custom_call.1']
    #allocation5 [shape = 'u8[24576]{0}', space=vmem, size = 0x6000, scoped, tag = 'input window, operand 1, single buffered']
    #allocation6 [shape = 's32[1]{0}', space=sflag, size = 0x4, scoped, tag = 'scoped memory for tpu_custom_call.1']
    #allocation7 [shape = 'u8[16384]{0}', space=vmem, size = 0x4000, scoped, tag = 'output window, operand 0, single buffered']
    %8 = vsyncpa [#allocation3], 0
    %9 = vsyncpa [#allocation6], 0
    %10 = vsyncpa [#allocation4], 0
    // Predicated region
    $region2: #{tpu_custom_call.1} parent=1 // pred_check
      _
    $region3: #{tpu_custom_call.1} parent=1 // pred_check_branch
      %12 = sbr.rel (0) target = $region5
    $region4: #{tpu_custom_call.1} parent=1 // pred_region
      %s14 = ssub.s32 512, 512
      %15 = vsyncadd [#allocation3], %s14
      %s16 = sshll.u32 [#allocation2], 4
      %s17 = int_to_ptr.vmem [resolvable:$true] %s16
      %22 = dma.hbm_to_vmem [thread:$0]  %s0, 512, %s17, [#allocation3], 128, 128, 8
    $region5: #{tpu_custom_call.1} parent=1 // pred_fallthru
      _
    // Predicated region
    $region6: #{tpu_custom_call.1} parent=1 // pred_check
      _
    $region7: #{tpu_custom_call.1} parent=1 // pred_check_branch
      %24 = sbr.rel (0) target = $region9
    $region8: #{tpu_custom_call.1} parent=1 // pred_region
      %s26 = ssub.s32 768, 768
      %27 = vsyncadd [#allocation6], %s26
      %s28 = sshll.u32 [#allocation5], 4
      %s29 = int_to_ptr.vmem [resolvable:$true] %s28
      %34 = dma.hbm_to_vmem [thread:$0]  %s1, 768, %s29, [#allocation6], 128, 128, 8
    $region9: #{tpu_custom_call.1} parent=1 // pred_fallthru
      _
    // Predicated region
    $region10: #{tpu_custom_call.1} parent=1 // pred_check
      _
    $region11: #{tpu_custom_call.1} parent=1 // pred_check_branch
      %36 = sbr.rel (0) target = $region13
    $region12: #{tpu_custom_call.1} parent=1 // pred_region
      _
    $region13: #{tpu_custom_call.1} parent=1 // pred_fallthru
      _
    // Predicated region
    $region14: #{tpu_custom_call.1} parent=1 // pred_check
      _
    $region15: #{tpu_custom_call.1} parent=1 // pred_check_branch
      %38 = sbr.rel (0) target = $region17
    $region16: #{tpu_custom_call.1} parent=1 // pred_region
      %39 = dma.done [#allocation3], 512
    $region17: #{tpu_custom_call.1} parent=1 // pred_fallthru
      _
    // Predicated region
    $region18: #{tpu_custom_call.1} parent=1 // pred_check
      _
    $region19: #{tpu_custom_call.1} parent=1 // pred_check_branch
      %41 = sbr.rel (0) target = $region21
    $region20: #{tpu_custom_call.1} parent=1 // pred_region
      %42 = dma.done [#allocation6], 768
    $region21: #{tpu_custom_call.1} parent=1 // pred_fallthru
      _
    %v43 = vld [vmem:[#allocation2] sm:$0xff]
    %v44 = vld [vmem:[#allocation2 + $0x8] sm:$0xff]
    %v45 = vld [vmem:[#allocation2 + $0x10] sm:$0xff]
    %v46 = vld [vmem:[#allocation2 + $0x18] sm:$0xff]
    %v47 = vld [vmem:[#allocation5] sm:$0xff]
    %v48 = vld [vmem:[#allocation5 + $0x8] sm:$0xff]
    %v49 = vld [vmem:[#allocation5 + $0x10] sm:$0xff]
    %v50 = vld [vmem:[#allocation5 + $0x18] sm:$0xff]
    %v51 = vld [vmem:[#allocation5 + $0x20] sm:$0xff]
    %v52 = vld [vmem:[#allocation5 + $0x28] sm:$0xff]
    %v53 = vld [vmem:[%s2] sm:$0x1]
    %v55 = vlaneseq
    %v56 = vshrl.u32 %v55, 7
    %v57 = vsub.s32 0, %v56
    %v58 = vrot.slane %v53, %v57
    %vm60 = vcmask 392192
    %v62 = vsel %vm60, %v43, 0
    %v65 = vsel %vm60, %v44, 0
    %v68 = vsel %vm60, %v45, 0
    %v71 = vsel %vm60, %v46, 0
    %73 = vmatprep.subr.mxu0 0.0
    %74 = vmatpush1.msra.mxu0 %v47
    %75 = vmatprep.subr.mxu0 0.0
    %76 = vmatpush1.msra.mxu0 %v48
    %77 = vmatprep.subr.mxu0 0.0
    %78 = vmatpush1.msra.mxu0 %v49
    %79 = vmatprep.subr.mxu0 0.0
    %80 = vmatpush1.msra.mxu0 %v50
    %81 = vmatprep.subr.mxu0 0.0
    %82 = vmatpush1.msra.mxu0 %v51
    %83 = vmatprep.subr.mxu0 0.0
    %84 = vmatpush1.msra.mxu0 %v52
    %85 = vmatprep.subr.mxu0 0.0
    %86 = vmatpush1.msra.mxu0 0.0
    %87 = vmatprep.subr.mxu0 0.0
    %88 = vmatpush1.msra.mxu0 0.0
    %89 = vmatprep.subr.mxu0 0.0
    %90 = vmatpush1.msra.mxu0 0.0
    %91 = vmatprep.subr.mxu0 0.0
    %92 = vmatpush1.msra.mxu0 0.0
    %93 = vmatprep.subr.mxu0 0.0
    %94 = vmatpush1.msra.mxu0 0.0
    %95 = vmatprep.subr.mxu0 0.0
    %96 = vmatpush1.msra.mxu0 0.0
    %97 = vmatprep.subr.mxu0 0.0
    %98 = vmatpush1.msra.mxu0 0.0
    %99 = vmatprep.subr.mxu0 0.0
    %100 = vmatpush1.msra.mxu0 0.0
    %101 = vmatprep.subr.mxu0 0.0
    %102 = vmatpush1.msra.mxu0 0.0
    %103 = vmatprep.subr.mxu0 0.0
    %104 = vmatpush1.msra.mxu0 0.0
    %105 = vmatprep.subr.mxu0 0.0
    %106 = vmatpush1.msra.mxu0 0.0
    %107 = vmatprep.subr.mxu0 0.0
    %108 = vmatpush1.msra.mxu0 0.0
    %109 = vmatprep.subr.mxu0 0.0
    %110 = vmatpush1.msra.mxu0 0.0
    %111 = vmatprep.subr.mxu0 0.0
    %112 = vmatpush1.msra.mxu0 0.0
    %113 = vmatprep.subr.mxu0 0.0
    %114 = vmatpush1.msra.mxu0 0.0
    %115 = vmatprep.subr.mxu0 0.0
    %116 = vmatpush1.msra.mxu0 0.0
    %117 = vmatprep.subr.mxu0 0.0
    %118 = vmatpush1.msra.mxu0 0.0
    %119 = vmatprep.subr.mxu0 0.0
    %120 = vmatpush1.msra.mxu0 0.0
    %121 = vmatprep.subr.mxu0 0.0
    %122 = vmatpush1.msra.mxu0 0.0
    %123 = vmatprep.subr.mxu0 0.0
    %124 = vmatpush1.msra.mxu0 0.0
    %125 = vmatprep.subr.mxu0 0.0
    %126 = vmatpush1.msra.mxu0 0.0
    %127 = vmatprep.subr.mxu0 0.0
    %128 = vmatpush1.msra.mxu0 0.0
    %129 = vmatprep.subr.mxu0 0.0
    %130 = vmatpush1.msra.mxu0 0.0
    %131 = vmatprep.subr.mxu0 0.0
    %132 = vmatpush1.msra.mxu0 0.0
    %133 = vmatprep.subr.mxu0 0.0
    %134 = vmatpush1.msra.mxu0 0.0
    %135 = vmatprep.subr.mxu0 0.0
    %136 = vmatpush1.msra.mxu0 0.0
    %137 = vmatprep.mubr.f32.mxu0 0.0
    %138 = vmatmul.mubr.f32.gmra.mrb[0].mxu0 %v62
    %v139 = vpop.f32.mrb[0].mxu0
    %v140 = vadd.f32 %v58, %v139
    %v141 = vpop.f32.mrb[0].mxu0
    %142 = vmatprep.mubr.f32.mxu0 0.0
    %143 = vmatmul.mubr.f32.gmra.mrb[0].mxu0 %v65
    %v144 = vpop.f32.mrb[0].mxu0
    %v145 = vadd.f32 %v58, %v144
    %v146 = vpop.f32.mrb[0].mxu0
    %147 = vmatprep.mubr.f32.mxu0 0.0
    %148 = vmatmul.mubr.f32.gmra.mrb[0].mxu0 %v68
    %v149 = vpop.f32.mrb[0].mxu0
    %v150 = vadd.f32 %v58, %v149
    %v151 = vpop.f32.mrb[0].mxu0
    %152 = vmatprep.mubr.f32.mxu0 0.0
    %153 = vmatmul.mubr.f32.gmra.mrb[0].mxu0 %v71
    %v154 = vpop.f32.mrb[0].mxu0
    %v155 = vadd.f32 %v58, %v154
    %v156 = vpop.f32.mrb[0].mxu0
    %157 = vdwg.mxu0
    %158 = vst [vmem:[#allocation7] sm:$0xff] %v140
    %159 = vst [vmem:[#allocation7 + $0x8] sm:$0xff] %v145
    %160 = vst [vmem:[#allocation7 + $0x10] sm:$0xff] %v150
    %161 = vst [vmem:[#allocation7 + $0x18] sm:$0xff] %v155
    // Predicated region
    $region22: #{tpu_custom_call.1} parent=1 // pred_check
      _
    $region23: #{tpu_custom_call.1} parent=1 // pred_check_branch
      %163 = sbr.rel (0) target = $region25
    $region24: #{tpu_custom_call.1} parent=1 // pred_region
      %s165 = ssub.s32 512, 512
      %166 = vsyncadd [#allocation4], %s165
      %s167 = sshll.u32 [#allocation7], 4
      %s168 = int_to_ptr.vmem [resolvable:$true] %s167
      %173 = dma.vmem_to_hbm [thread:$0]  %s168, 512, %s3, [#allocation4], 128, 128, 8
    $region25: #{tpu_custom_call.1} parent=1 // pred_fallthru
      _
    // Predicated region
    $region26: #{tpu_custom_call.1} parent=1 // pred_check
      _
    $region27: #{tpu_custom_call.1} parent=1 // pred_check_branch
      %175 = sbr.rel (0) target = $region29
    $region28: #{tpu_custom_call.1} parent=1 // pred_region
      %176 = dma.done [#allocation4], 512
    $region29: #{tpu_custom_call.1} parent=1 // pred_fallthru
      _
    %177 = vsyncpa [#allocation3], 1
    %178 = vsyncpa [#allocation6], 1
    %179 = vsyncpa [#allocation4], 1

</llo_original>
